<compile_context>
chip_gen: v7x
topology: tpu7x:2x2x1
jax: 0.10.0
libtpu: 0.0.40
codegen_flags: <defaults>
</compile_context>

<pallas_src>
import math

import jax
import jax.numpy as jnp
import numpy as np
from jax.experimental import pallas as pl
from jax.experimental.pallas import tpu as pltpu

_MIB = 1024 * 1024


def _tpu_config():
    """Return (vmem_limit_bytes, block_bytes, multi_tc) for the local chip."""
    kind = ""
    try:
        kind = jax.devices()[0].device_kind.lower()
    except Exception:
        pass
    vmem_cap = None
    try:
        vmem_cap = int(pltpu.get_tpu_info().vmem_capacity_bytes)
    except Exception:
        pass

    if "7x" in kind or "v7" in kind:
        # v7x: 64 MiB VMEM per TC, 2 TCs/chip, ~3.2 TB/s HBM.
        # Keep 2x(in)+2x(out) double-buffers (+weights/temps) well under 48 MiB.
        return 48 * _MIB, 5 * _MIB, True
    if "v6" in kind or "v5" in kind:
        # v5e/v6e: 128 MiB physical VMEM, single TC.  Raise the scoped limit
        # well above the 16/32 MiB defaults and use large blocks to amortize
        # the ~0.35 us per-grid-step overhead.
        return 96 * _MIB, 12 * _MIB, False
    # Unknown generation: size conservatively off the reported capacity.
    if vmem_cap:
        limit = min(vmem_cap * 3 // 4, 96 * _MIB)
        return limit, max(_MIB, limit // 8), False
    return 24 * _MIB, 2 * _MIB, False


def _se_att_kernel(x_ref, w1_ref, b1_ref, w2_ref, b2_ref, o_ref):
    # x_ref block: (TB, C, HW). Fused squeeze -> excitation -> scale.
    inv_hw = 1.0 / x_ref.shape[-1]

    # Squeeze: global average pool over the spatial (lane) axis, accumulated
    # in f32 directly from the ref (no block-sized f32 temp kept live).
    y = jnp.sum(x_ref[...], axis=-1, dtype=jnp.float32) * inv_hw      # (TB, C)

    # Excitation: Linear -> ReLU -> Linear -> Sigmoid (all tiny, f32).
    h = jnp.dot(y, w1_ref[...].astype(jnp.float32),
                preferred_element_type=jnp.float32)
    h = jnp.maximum(h + b1_ref[...].astype(jnp.float32), 0.0)          # (TB, Ch)
    logits = jnp.dot(h, w2_ref[...].astype(jnp.float32),
                     preferred_element_type=jnp.float32)
    logits = logits + b2_ref[...].astype(jnp.float32)                  # (TB, C)
    z = jax.nn.sigmoid(logits)                                         # (TB, C)

    # Scale: re-read x from VMEM (cheap) and broadcast the gate over lanes.
    gate = z.astype(x_ref.dtype)[:, :, None]
    o_ref[...] = (x_ref[...] * gate).astype(o_ref.dtype)


def se_att_block(x, w1, b1, w2, b2):
    """SE channel-attention forward.

    x : (B, C, H, W)
    w1: (C, Ch), b1: (Ch,)   -- first Linear (Ch = C // ratio), stored (in,out)
    w2: (Ch, C), b2: (C,)    -- second Linear
    Returns (B, C, H, W) = x * sigmoid(MLP(avgpool(x))) per channel.
    """
    B, C, H, W = x.shape
    Ch = w1.shape[1]
    HW = H * W

    vmem_limit, block_bytes, multi_tc = _tpu_config()

    x3 = x.reshape(B, C, HW)                  # free reshape, no transpose
    b1_2d = b1.reshape(1, Ch)
    b2_2d = b2.reshape(1, C)

    # ---- batch tile selection -------------------------------------------
    per_batch = C * HW * x.dtype.itemsize
    tb = max(1, min(B, block_bytes // max(per_batch, 1)))
    if multi_tc and B >= 2:
        # Keep >= 2 "parallel" grid steps so both v7x TensorCores get work.
        tb = min(tb, (B + 1) // 2)
    if tb >= 8:
        tb -= tb % 8                          # sublane-align the MLP M dim
    # Prefer an exact divisor of B near tb (no revisits).  For awkward /
    # prime B keep tb and let the last clamped block revisit a few rows:
    # the per-batch-row computation is idempotent, so this is safe.
    div = max(d for d in range(1, tb + 1) if B % d == 0)
    if 2 * div >= tb:
        tb = div
    grid = (pl.cdiv(B, tb),)

    itemsize = x.dtype.itemsize
    cost = pl.CostEstimate(
        flops=2 * B * C * HW + 4 * B * C * Ch,
        transcendentals=B * C,
        bytes_accessed=2 * B * C * HW * itemsize,
    )

    out = pl.pallas_call(
        _se_att_kernel,
        out_shape=jax.ShapeDtypeStruct((B, C, HW), x.dtype),
        grid=grid,
        in_specs=[
            pl.BlockSpec((tb, C, HW), lambda b: (b, 0, 0)),
            pl.BlockSpec((C, Ch), lambda b: (0, 0)),   # VMEM-resident weights
            pl.BlockSpec((1, Ch), lambda b: (0, 0)),
            pl.BlockSpec((Ch, C), lambda b: (0, 0)),
            pl.BlockSpec((1, C), lambda b: (0, 0)),
        ],
        out_specs=pl.BlockSpec((tb, C, HW), lambda b: (b, 0, 0)),
        compiler_params=pltpu.CompilerParams(
            dimension_semantics=("parallel",),
            vmem_limit_bytes=vmem_limit,
        ),
        cost_estimate=cost,
    )(x3, w1, b1_2d, w2, b2_2d)

    return out.reshape(B, C, H, W)


def se_att_ref(x, w1, b1, w2, b2):
    """Pure-JAX reference mirroring the PyTorch forward."""
    y = jnp.mean(x, axis=(2, 3))                          # squeeze -> (B, C)
    h = jax.nn.relu(y @ w1 + b1)
    z = jax.nn.sigmoid(h @ w2 + b2)                       # (B, C)
    return x * z[:, :, None, None]


if __name__ == "__main__":
    B, C, H, W = 2, 64, 16, 16
    ratio = 16
    Ch = C // ratio                                       # 4

    key = jax.random.PRNGKey(0)
    k1, k2, k3, k4, k5 = jax.random.split(key, 5)
    x = jax.random.normal(k1, (B, C, H, W), dtype=jnp.float32)
    # nn.Linear-equivalent params, stored as (in, out) / (out,)
    w1 = jax.random.normal(k2, (C, Ch), dtype=jnp.float32) * (1.0 / math.sqrt(C))
    b1 = jax.random.normal(k3, (Ch,), dtype=jnp.float32) * 0.1
    w2 = jax.random.normal(k4, (Ch, C), dtype=jnp.float32) * (1.0 / math.sqrt(Ch))
    b2 = jax.random.normal(k5, (C,), dtype=jnp.float32) * 0.1

    out = se_att_block(x, w1, b1, w2, b2)
    out = jax.block_until_ready(out)

    ref = se_att_ref(x, w1, b1, w2, b2)
    np.testing.assert_allclose(np.asarray(out), np.asarray(ref),
                               rtol=1e-5, atol=1e-5)

    assert out.shape == (B, C, H, W)
    print("KERNEL_OK")
</pallas_src>

<mosaic_0001>
module attributes {stable_mosaic.version = 11 : i64} {
  func.func @_se_att_kernel(%arg0: i32, %arg1: memref<2x64x256xf32, #tpu.memory_space<vmem>>, %arg2: memref<64x4xf32, #tpu.memory_space<vmem>>, %arg3: memref<1x4xf32, #tpu.memory_space<vmem>>, %arg4: memref<4x64xf32, #tpu.memory_space<vmem>>, %arg5: memref<1x64xf32, #tpu.memory_space<vmem>>, %arg6: memref<2x64x256xf32, #tpu.memory_space<vmem>>) attributes {dimension_semantics = [#tpu.dimension_semantics<parallel>], iteration_bounds = array<i64: 1>, scalar_prefetch = 0 : i64, scratch_operands = 0 : i64, tpu.core_type = #tpu.core_type<tc>, window_params = [{transform_indices = @transform_0, window_bounds = array<i64: 2, 64, 256>}, {pipeline_mode = #tpu.pipeline_mode<synchronous>, transform_indices = @transform_1, window_bounds = array<i64: 64, 4>}, {pipeline_mode = #tpu.pipeline_mode<synchronous>, transform_indices = @transform_2, window_bounds = array<i64: 1, 4>}, {pipeline_mode = #tpu.pipeline_mode<synchronous>, transform_indices = @transform_3, window_bounds = array<i64: 4, 64>}, {pipeline_mode = #tpu.pipeline_mode<synchronous>, transform_indices = @transform_4, window_bounds = array<i64: 1, 64>}, {transform_indices = @transform_5, window_bounds = array<i64: 2, 64, 256>}]} {
    %c0 = arith.constant 0 : index
    %c0_0 = arith.constant 0 : index
    %c0_1 = arith.constant 0 : index
    %0 = vector.load %arg1[%c0, %c0_0, %c0_1] : memref<2x64x256xf32, #tpu.memory_space<vmem>>, vector<2x64x256xf32>
    %cst = arith.constant dense<0.000000e+00> : vector<2x64xf32>
    %1 = vector.multi_reduction <add>, %0, %cst [2] : vector<2x64x256xf32> to vector<2x64xf32>
    %cst_2 = arith.constant 3.906250e-03 : f32
    %2 = vector.broadcast %cst_2 : f32 to vector<2x64xf32>
    %3 = arith.mulf %1, %2 : vector<2x64xf32>
    %c0_3 = arith.constant 0 : index
    %c0_4 = arith.constant 0 : index
    %4 = vector.load %arg2[%c0_3, %c0_4] : memref<64x4xf32, #tpu.memory_space<vmem>>, vector<64x4xf32>
    %cst_5 = arith.constant dense<0.000000e+00> : vector<2x4xf32>
    %5 = tpu.matmul %3, %4, %cst_5 {dimension_numbers = #tpu.dot_dimension_numbers<[1], [0], [0], [1], [0, 0, 1, 1], [], []>} : vector<2x64xf32>, vector<64x4xf32>, vector<2x4xf32> -> vector<2x4xf32>
    %c0_6 = arith.constant 0 : index
    %c0_7 = arith.constant 0 : index
    %6 = vector.load %arg3[%c0_6, %c0_7] : memref<1x4xf32, #tpu.memory_space<vmem>>, vector<1x4xf32>
    %7 = vector.broadcast %6 : vector<1x4xf32> to vector<2x4xf32>
    %8 = arith.addf %5, %7 : vector<2x4xf32>
    %cst_8 = arith.constant 0.000000e+00 : f32
    %9 = vector.broadcast %cst_8 : f32 to vector<2x4xf32>
    %10 = arith.maximumf %8, %9 : vector<2x4xf32>
    %c0_9 = arith.constant 0 : index
    %c0_10 = arith.constant 0 : index
    %11 = vector.load %arg4[%c0_9, %c0_10] : memref<4x64xf32, #tpu.memory_space<vmem>>, vector<4x64xf32>
    %cst_11 = arith.constant dense<0.000000e+00> : vector<2x64xf32>
    %12 = tpu.matmul %10, %11, %cst_11 {dimension_numbers = #tpu.dot_dimension_numbers<[1], [0], [0], [1], [0, 0, 1, 1], [], []>} : vector<2x4xf32>, vector<4x64xf32>, vector<2x64xf32> -> vector<2x64xf32>
    %c0_12 = arith.constant 0 : index
    %c0_13 = arith.constant 0 : index
    %13 = vector.load %arg5[%c0_12, %c0_13] : memref<1x64xf32, #tpu.memory_space<vmem>>, vector<1x64xf32>
    %14 = vector.broadcast %13 : vector<1x64xf32> to vector<2x64xf32>
    %15 = arith.addf %12, %14 : vector<2x64xf32>
    %16 = arith.negf %15 : vector<2x64xf32>
    %17 = math.exp %16 : vector<2x64xf32>
    %cst_14 = arith.constant 1.000000e+00 : f32
    %18 = vector.broadcast %cst_14 : f32 to vector<2x64xf32>
    %19 = arith.addf %18, %17 : vector<2x64xf32>
    %20 = arith.divf %18, %19 : vector<2x64xf32>
    %21 = vector.shape_cast %20 : vector<2x64xf32> to vector<2x64x1xf32>
    %c0_15 = arith.constant 0 : index
    %c0_16 = arith.constant 0 : index
    %c0_17 = arith.constant 0 : index
    %22 = vector.load %arg1[%c0_15, %c0_16, %c0_17] : memref<2x64x256xf32, #tpu.memory_space<vmem>>, vector<2x64x256xf32>
    %23 = vector.broadcast %21 : vector<2x64x1xf32> to vector<2x64x256xf32>
    %24 = arith.mulf %22, %23 : vector<2x64x256xf32>
    %c0_18 = arith.constant 0 : index
    %c0_19 = arith.constant 0 : index
    %c0_20 = arith.constant 0 : index
    %25 = vector.load %arg6[%c0_18, %c0_19, %c0_20] : memref<2x64x256xf32, #tpu.memory_space<vmem>>, vector<2x64x256xf32>
    tpu.vector_store %arg6[%c0_18, %c0_19, %c0_20], %24 {strides = array<i32>} : memref<2x64x256xf32, #tpu.memory_space<vmem>>, vector<2x64x256xf32>,
    return
  }
  func.func @transform_0(%arg0: i32) -> (i32, i32, i32) {
    %c0_i32 = arith.constant 0 : i32
    %c0_i32_0 = arith.constant 0 : i32
    %c0_i32_1 = arith.constant 0 : i32
    return %arg0, %c0_i32, %c0_i32_0 : i32, i32, i32
  }
  func.func @transform_1(%arg0: i32) -> (i32, i32) {
    %c0_i32 = arith.constant 0 : i32
    %c0_i32_0 = arith.constant 0 : i32
    %c0_i32_1 = arith.constant 0 : i32
    return %c0_i32, %c0_i32_0 : i32, i32
  }
  func.func @transform_2(%arg0: i32) -> (i32, i32) {
    %c0_i32 = arith.constant 0 : i32
    %c0_i32_0 = arith.constant 0 : i32
    %c0_i32_1 = arith.constant 0 : i32
    return %c0_i32, %c0_i32_0 : i32, i32
  }
  func.func @transform_3(%arg0: i32) -> (i32, i32) {
    %c0_i32 = arith.constant 0 : i32
    %c0_i32_0 = arith.constant 0 : i32
    %c0_i32_1 = arith.constant 0 : i32
    return %c0_i32, %c0_i32_0 : i32, i32
  }
  func.func @transform_4(%arg0: i32) -> (i32, i32) {
    %c0_i32 = arith.constant 0 : i32
    %c0_i32_0 = arith.constant 0 : i32
    %c0_i32_1 = arith.constant 0 : i32
    return %c0_i32, %c0_i32_0 : i32, i32
  }
  func.func @transform_5(%arg0: i32) -> (i32, i32, i32) {
    %c0_i32 = arith.constant 0 : i32
    %c0_i32_0 = arith.constant 0 : i32
    %c0_i32_1 = arith.constant 0 : i32
    return %arg0, %c0_i32, %c0_i32_0 : i32, i32, i32
  }
}

</mosaic_0001>

<llo_original>
// kernel: tpu_custom_call.1
$region0: #{tpu_custom_call.1}
  #allocation0 [shape = 'u32[]', space=smem, size = 0x4, offset = 0x4, fixed_abs, tag = 'smem constant byte address 0x4 - core index']
  #allocation1 [shape = 'u32[144,128]{1,0:T(1,128)}', space=vmem, size = 0x12000, scoped, tag = 'internal scratch']
  %s0 = inlined_call_operand.hbm [shape: f32[2,64,256], index: 0, kind: input, shape index: {}]
  %s1 = inlined_call_operand.vmem [shape: f32[64,4], index: 1, kind: input, shape index: {}]
  %s2 = inlined_call_operand.vmem [shape: f32[1,4], index: 2, kind: input, shape index: {}]
  %s3 = inlined_call_operand.vmem [shape: f32[4,64], index: 3, kind: input, shape index: {}]
  %s4 = inlined_call_operand.vmem [shape: f32[1,64], index: 4, kind: input, shape index: {}]
  %s5 = inlined_call_operand.hbm [shape: f32[2,64,256], index: 5, kind: output, shape index: {}]
  %s6 = sld [smem:[#allocation0]]
  $region34: #{tpu_custom_call.1} parent=0
    _
  %s8 = ssub.s32 1, %s6
  %s9 = scalar_select 0, %s8, %s6
  $region1: #{tpu_custom_call.1} parent=0
    #allocation2 [shape = 'u8[131072]{0}', space=vmem, size = 0x20000, scoped, tag = 'input window, operand 0, single buffered']
    #allocation3 [shape = 's32[1]{0}', space=sflag, size = 0x4, scoped, tag = 'scoped memory for tpu_custom_call.1']
    #allocation4 [shape = 's32[1]{0}', space=sflag, size = 0x4, scoped, tag = 'scoped memory for tpu_custom_call.1']
    #allocation5 [shape = 'u8[131072]{0}', space=vmem, size = 0x20000, scoped, tag = 'output window, operand 0, single buffered']
    %10 = vsyncpa [#allocation3], 0
    %11 = vsyncpa [#allocation4], 0
    // Predicated region
    $region2: #{tpu_custom_call.1} parent=1 // pred_check
      _
    $region3: #{tpu_custom_call.1} parent=1 // pred_check_branch
      %13 = sbr.rel (0) target = $region5
    $region4: #{tpu_custom_call.1} parent=1 // pred_region
      %s15 = ssub.s32 4096, 4096
      %16 = vsyncadd [#allocation3], %s15
      %s17 = sshll.u32 [#allocation2], 4
      %s18 = int_to_ptr.vmem [resolvable:$true] %s17
      %23 = dma.hbm_to_vmem [thread:$0]  %s0, 4096, %s18, [#allocation3], 256, 256, 16
    $region5: #{tpu_custom_call.1} parent=1 // pred_fallthru
      _
    // Predicated region
    $region6: #{tpu_custom_call.1} parent=1 // pred_check
      _
    $region7: #{tpu_custom_call.1} parent=1 // pred_check_branch
      %25 = sbr.rel (0) target = $region9
    $region8: #{tpu_custom_call.1} parent=1 // pred_region
      _
    $region9: #{tpu_custom_call.1} parent=1 // pred_fallthru
      _
    // Predicated region
    $region10: #{tpu_custom_call.1} parent=1 // pred_check
      _
    $region11: #{tpu_custom_call.1} parent=1 // pred_check_branch
      %27 = sbr.rel (0) target = $region13
    $region12: #{tpu_custom_call.1} parent=1 // pred_region
      _
    $region13: #{tpu_custom_call.1} parent=1 // pred_fallthru
      _
    // Predicated region
    $region14: #{tpu_custom_call.1} parent=1 // pred_check
      _
    $region15: #{tpu_custom_call.1} parent=1 // pred_check_branch
      %29 = sbr.rel (0) target = $region17
    $region16: #{tpu_custom_call.1} parent=1 // pred_region
      _
    $region17: #{tpu_custom_call.1} parent=1 // pred_fallthru
      _
    // Predicated region
    $region18: #{tpu_custom_call.1} parent=1 // pred_check
      _
    $region19: #{tpu_custom_call.1} parent=1 // pred_check_branch
      %31 = sbr.rel (0) target = $region21
    $region20: #{tpu_custom_call.1} parent=1 // pred_region
      _
    $region21: #{tpu_custom_call.1} parent=1 // pred_fallthru
      _
    // Predicated region
    $region22: #{tpu_custom_call.1} parent=1 // pred_check
      _
    $region23: #{tpu_custom_call.1} parent=1 // pred_check_branch
      %33 = sbr.rel (0) target = $region25
    $region24: #{tpu_custom_call.1} parent=1 // pred_region
      %34 = dma.done [#allocation3], 4096
    $region25: #{tpu_custom_call.1} parent=1 // pred_fallthru
      _
    %v35 = vld [vmem:[#allocation2] sm:$0xff]
    %v36 = vld [vmem:[#allocation2 + $0x8] sm:$0xff]
    %v37 = vld [vmem:[#allocation2 + $0x10] sm:$0xff]
    %v38 = vld [vmem:[#allocation2 + $0x18] sm:$0xff]
    %v39 = vld [vmem:[#allocation2 + $0x20] sm:$0xff]
    %v40 = vld [vmem:[#allocation2 + $0x28] sm:$0xff]
    %v41 = vld [vmem:[#allocation2 + $0x30] sm:$0xff]
    %v42 = vld [vmem:[#allocation2 + $0x38] sm:$0xff]
    %v43 = vld [vmem:[#allocation2 + $0x40] sm:$0xff]
    %v44 = vld [vmem:[#allocation2 + $0x48] sm:$0xff]
    %v45 = vld [vmem:[#allocation2 + $0x50] sm:$0xff]
    %v46 = vld [vmem:[#allocation2 + $0x58] sm:$0xff]
    %v47 = vld [vmem:[#allocation2 + $0x60] sm:$0xff]
    %v48 = vld [vmem:[#allocation2 + $0x68] sm:$0xff]
    %v49 = vld [vmem:[#allocation2 + $0x70] sm:$0xff]
    %v50 = vld [vmem:[#allocation2 + $0x78] sm:$0xff]
    %v51 = vld [vmem:[#allocation2 + $0x80] sm:$0xff]
    %v52 = vld [vmem:[#allocation2 + $0x88] sm:$0xff]
    %v53 = vld [vmem:[#allocation2 + $0x90] sm:$0xff]
    %v54 = vld [vmem:[#allocation2 + $0x98] sm:$0xff]
    %v55 = vld [vmem:[#allocation2 + $0xa0] sm:$0xff]
    %v56 = vld [vmem:[#allocation2 + $0xa8] sm:$0xff]
    %v57 = vld [vmem:[#allocation2 + $0xb0] sm:$0xff]
    %v58 = vld [vmem:[#allocation2 + $0xb8] sm:$0xff]
    %v59 = vld [vmem:[#allocation2 + $0xc0] sm:$0xff]
    %v60 = vld [vmem:[#allocation2 + $0xc8] sm:$0xff]
    %v61 = vld [vmem:[#allocation2 + $0xd0] sm:$0xff]
    %v62 = vld [vmem:[#allocation2 + $0xd8] sm:$0xff]
    %v63 = vld [vmem:[#allocation2 + $0xe0] sm:$0xff]
    %v64 = vld [vmem:[#allocation2 + $0xe8] sm:$0xff]
    %v65 = vld [vmem:[#allocation2 + $0xf0] sm:$0xff]
    %v66 = vld [vmem:[#allocation2 + $0xf8] sm:$0xff]
    %v67 = vadd.f32 %v35, %v36
    %68 = vadd.xlane.f32.xlu0 %v67
    %v69 = vpop.xlane.xlu0 %68
    %v70 = vadd.f32 %v37, %v38
    %71 = vadd.xlane.f32.xlu0 %v70
    %v72 = vpop.xlane.xlu0 %71
    %v73 = vadd.f32 %v39, %v40
    %74 = vadd.xlane.f32.xlu0 %v73
    %v75 = vpop.xlane.xlu0 %74
    %v76 = vadd.f32 %v41, %v42
    %77 = vadd.xlane.f32.xlu0 %v76
    %v78 = vpop.xlane.xlu0 %77
    %v79 = vadd.f32 %v43, %v44
    %80 = vadd.xlane.f32.xlu0 %v79
    %v81 = vpop.xlane.xlu0 %80
    %v82 = vadd.f32 %v45, %v46
    %83 = vadd.xlane.f32.xlu0 %v82
    %v84 = vpop.xlane.xlu0 %83
    %v85 = vadd.f32 %v47, %v48
    %86 = vadd.xlane.f32.xlu0 %v85
    %v87 = vpop.xlane.xlu0 %86
    %v88 = vadd.f32 %v49, %v50
    %89 = vadd.xlane.f32.xlu0 %v88
    %v90 = vpop.xlane.xlu0 %89
    %v91 = vadd.f32 %v51, %v52
    %92 = vadd.xlane.f32.xlu0 %v91
    %v93 = vpop.xlane.xlu0 %92
    %v94 = vadd.f32 %v53, %v54
    %95 = vadd.xlane.f32.xlu0 %v94
    %v96 = vpop.xlane.xlu0 %95
    %v97 = vadd.f32 %v55, %v56
    %98 = vadd.xlane.f32.xlu0 %v97
    %v99 = vpop.xlane.xlu0 %98
    %v100 = vadd.f32 %v57, %v58
    %101 = vadd.xlane.f32.xlu0 %v100
    %v102 = vpop.xlane.xlu0 %101
    %v103 = vadd.f32 %v59, %v60
    %104 = vadd.xlane.f32.xlu0 %v103
    %v105 = vpop.xlane.xlu0 %104
    %v106 = vadd.f32 %v61, %v62
    %107 = vadd.xlane.f32.xlu0 %v106
    %v108 = vpop.xlane.xlu0 %107
    %v109 = vadd.f32 %v63, %v64
    %110 = vadd.xlane.f32.xlu0 %v109
    %v111 = vpop.xlane.xlu0 %110
    %v112 = vadd.f32 %v65, %v66
    %113 = vadd.xlane.f32.xlu0 %v112
    %v114 = vpop.xlane.xlu0 %113
    %v115 = vmul.f32 %v69, 0.00390625
    %v116 = vmul.f32 %v72, 0.00390625
    %v117 = vmul.f32 %v75, 0.00390625
    %v118 = vmul.f32 %v78, 0.00390625
    %v119 = vmul.f32 %v81, 0.00390625
    %v120 = vmul.f32 %v84, 0.00390625
    %v121 = vmul.f32 %v87, 0.00390625
    %v122 = vmul.f32 %v90, 0.00390625
    %v123 = vmul.f32 %v93, 0.00390625
    %v124 = vmul.f32 %v96, 0.00390625
    %v125 = vmul.f32 %v99, 0.00390625
    %v126 = vmul.f32 %v102, 0.00390625
    %v127 = vmul.f32 %v105, 0.00390625
    %v128 = vmul.f32 %v108, 0.00390625
    %v129 = vmul.f32 %v111, 0.00390625
    %v130 = vmul.f32 %v114, 0.00390625
    %v131 = vld [vmem:[%s1] sm:$0xff]
    %v132 = vld [vmem:[%s1 + $0x8] sm:$0xff]
    %v133 = vld [vmem:[%s1 + $0x10] sm:$0xff]
    %v134 = vld [vmem:[%s1 + $0x18] sm:$0xff]
    %v135 = vld [vmem:[%s1 + $0x20] sm:$0xff]
    %v136 = vld [vmem:[%s1 + $0x28] sm:$0xff]
    %v137 = vld [vmem:[%s1 + $0x30] sm:$0xff]
    %v138 = vld [vmem:[%s1 + $0x38] sm:$0xff]
    %v139 = vld [vmem:[%s2] sm:$0x1]
    %v141 = vlaneseq
    %v142 = vshrl.u32 %v141, 7
    %v143 = vsub.s32 0, %v142
    %v144 = vrot.slane %v139, %v143
    %v162 = vlaneseq
    %v163 = vand.u32 %v162, 127
    %v164 = vlaneseq
    %v165 = vshrl.u32 %v164, 7
    %v166 = vsub.s32 %v163, %v165
    %v167 = vrot.slane %v115, %v166
    %v168 = vadd.s32 %v163, 4294967288
    %v169 = vlaneseq
    %v170 = vshrl.u32 %v169, 7
    %v171 = vsub.s32 %v168, %v170
    %v172 = vrot.slane %v116, %v171
    %vm173 = vcmask 130112
    %v174 = vsel %vm173, %v172, %v167
    %v175 = vadd.s32 %v163, 4294967280
    %v176 = vlaneseq
    %v177 = vshrl.u32 %v176, 7
    %v178 = vsub.s32 %v175, %v177
    %v179 = vrot.slane %v117, %v178
    %vm180 = vcmask 195712
    %v181 = vsel %vm180, %v179, %v174
    %v182 = vadd.s32 %v163, 4294967272
    %v183 = vlaneseq
    %v184 = vshrl.u32 %v183, 7
    %v185 = vsub.s32 %v182, %v184
    %v186 = vrot.slane %v118, %v185
    %vm187 = vcmask 261312
    %v188 = vsel %vm187, %v186, %v181
    %v189 = vadd.s32 %v163, 4294967264
    %v190 = vlaneseq
    %v191 = vshrl.u32 %v190, 7
    %v192 = vsub.s32 %v189, %v191
    %v193 = vrot.slane %v119, %v192
    %vm194 = vcmask 326912
    %v195 = vsel %vm194, %v193, %v188
    %v196 = vadd.s32 %v163, 4294967256
    %v197 = vlaneseq
    %v198 = vshrl.u32 %v197, 7
    %v199 = vsub.s32 %v196, %v198
    %v200 = vrot.slane %v120, %v199
    %vm201 = vcmask 392512
    %v202 = vsel %vm201, %v200, %v195
    %v203 = vadd.s32 %v163, 4294967248
    %v204 = vlaneseq
    %v205 = vshrl.u32 %v204, 7
    %v206 = vsub.s32 %v203, %v205
    %v207 = vrot.slane %v121, %v206
    %vm208 = vcmask 458112
    %v209 = vsel %vm208, %v207, %v202
    %v210 = vadd.s32 %v163, 4294967240
    %v211 = vlaneseq
    %v212 = vshrl.u32 %v211, 7
    %v213 = vsub.s32 %v210, %v212
    %v214 = vrot.slane %v122, %v213
    %vm215 = vcmask 523712
    %v216 = vsel %vm215, %v214, %v209
    %v217 = vlaneseq
    %v218 = vshrl.u32 %v217, 7
    %v219 = vsub.s32 %v163, %v218
    %v220 = vrot.slane %v123, %v219
    %v221 = vlaneseq
    %v222 = vshrl.u32 %v221, 7
    %v223 = vsub.s32 %v168, %v222
    %v224 = vrot.slane %v124, %v223
    %v225 = vsel %vm173, %v224, %v220
    %v226 = vlaneseq
    %v227 = vshrl.u32 %v226, 7
    %v228 = vsub.s32 %v175, %v227
    %v229 = vrot.slane %v125, %v228
    %v230 = vsel %vm180, %v229, %v225
    %v231 = vlaneseq
    %v232 = vshrl.u32 %v231, 7
    %v233 = vsub.s32 %v182, %v232
    %v234 = vrot.slane %v126, %v233
    %v235 = vsel %vm187, %v234, %v230
    %v236 = vlaneseq
    %v237 = vshrl.u32 %v236, 7
    %v238 = vsub.s32 %v189, %v237
    %v239 = vrot.slane %v127, %v238
    %v240 = vsel %vm194, %v239, %v235
    %v241 = vlaneseq
    %v242 = vshrl.u32 %v241, 7
    %v243 = vsub.s32 %v196, %v242
    %v244 = vrot.slane %v128, %v243
    %v245 = vsel %vm201, %v244, %v240
    %v246 = vlaneseq
    %v247 = vshrl.u32 %v246, 7
    %v248 = vsub.s32 %v203, %v247
    %v249 = vrot.slane %v129, %v248
    %v250 = vsel %vm208, %v249, %v245
    %v251 = vlaneseq
    %v252 = vshrl.u32 %v251, 7
    %v253 = vsub.s32 %v210, %v252
    %v254 = vrot.slane %v130, %v253
    %v255 = vsel %vm215, %v254, %v250
    %vm256 = vcmask 1041409
    %v257 = vsel %vm256, %v255, %v216
    %vm258 = vcmask 523264
    %v259 = vsel %vm258, %v257, 0
    %261 = vmatprep.subr.mxu0 0.0
    %262 = vmatpush1.msra.mxu0 %v131
    %263 = vmatprep.subr.mxu0 0.0
    %264 = vmatpush1.msra.mxu0 %v132
    %265 = vmatprep.subr.mxu0 0.0
    %266 = vmatpush1.msra.mxu0 %v133
    %267 = vmatprep.subr.mxu0 0.0
    %268 = vmatpush1.msra.mxu0 %v134
    %269 = vmatprep.subr.mxu0 0.0
    %270 = vmatpush1.msra.mxu0 %v135
    %271 = vmatprep.subr.mxu0 0.0
    %272 = vmatpush1.msra.mxu0 %v136
    %273 = vmatprep.subr.mxu0 0.0
    %274 = vmatpush1.msra.mxu0 %v137
    %275 = vmatprep.subr.mxu0 0.0
    %276 = vmatpush1.msra.mxu0 %v138
    %277 = vmatprep.subr.mxu0 0.0
    %278 = vmatpush1.msra.mxu0 0.0
    %279 = vmatprep.subr.mxu0 0.0
    %280 = vmatpush1.msra.mxu0 0.0
    %281 = vmatprep.subr.mxu0 0.0
    %282 = vmatpush1.msra.mxu0 0.0
    %283 = vmatprep.subr.mxu0 0.0
    %284 = vmatpush1.msra.mxu0 0.0
    %285 = vmatprep.subr.mxu0 0.0
    %286 = vmatpush1.msra.mxu0 0.0
    %287 = vmatprep.subr.mxu0 0.0
    %288 = vmatpush1.msra.mxu0 0.0
    %289 = vmatprep.subr.mxu0 0.0
    %290 = vmatpush1.msra.mxu0 0.0
    %291 = vmatprep.subr.mxu0 0.0
    %292 = vmatpush1.msra.mxu0 0.0
    %293 = vmatprep.subr.mxu0 0.0
    %294 = vmatpush1.msra.mxu0 0.0
    %295 = vmatprep.subr.mxu0 0.0
    %296 = vmatpush1.msra.mxu0 0.0
    %297 = vmatprep.subr.mxu0 0.0
    %298 = vmatpush1.msra.mxu0 0.0
    %299 = vmatprep.subr.mxu0 0.0
    %300 = vmatpush1.msra.mxu0 0.0
    %301 = vmatprep.subr.mxu0 0.0
    %302 = vmatpush1.msra.mxu0 0.0
    %303 = vmatprep.subr.mxu0 0.0
    %304 = vmatpush1.msra.mxu0 0.0
    %305 = vmatprep.subr.mxu0 0.0
    %306 = vmatpush1.msra.mxu0 0.0
    %307 = vmatprep.subr.mxu0 0.0
    %308 = vmatpush1.msra.mxu0 0.0
    %309 = vmatprep.subr.mxu0 0.0
    %310 = vmatpush1.msra.mxu0 0.0
    %311 = vmatprep.subr.mxu0 0.0
    %312 = vmatpush1.msra.mxu0 0.0
    %313 = vmatprep.subr.mxu0 0.0
    %314 = vmatpush1.msra.mxu0 0.0
    %315 = vmatprep.subr.mxu0 0.0
    %316 = vmatpush1.msra.mxu0 0.0
    %317 = vmatprep.subr.mxu0 0.0
    %318 = vmatpush1.msra.mxu0 0.0
    %319 = vmatprep.subr.mxu0 0.0
    %320 = vmatpush1.msra.mxu0 0.0
    %321 = vmatprep.subr.mxu0 0.0
    %322 = vmatpush1.msra.mxu0 0.0
    %323 = vmatprep.subr.mxu0 0.0
    %324 = vmatpush1.msra.mxu0 0.0
    %325 = vmatprep.mubr.f32.mxu0 0.0
    %326 = vmatmul.mubr.f32.gmra.mrb[0].mxu0 %v259
    %v327 = vpop.f32.mrb[0].mxu0
    %v328 = vadd.f32 %v144, %v327
    %v329 = vpop.f32.mrb[0].mxu0
    %330 = vdwg.mxu0
    %v331 = vmax.f32 %v328, 0.0
    %v332 = vld [vmem:[%s3] sm:$0xf]
    %v333 = vld [vmem:[%s4] sm:$0x1]
    %v335 = vlaneseq
    %v336 = vshrl.u32 %v335, 7
    %v337 = vsub.s32 0, %v336
    %v338 = vrot.slane %v333, %v337
    %vm340 = vcmask 31744
    %v342 = vsel %vm340, %v331, 0
    %vm344 = vcmask 1043456
    %v346 = vsel %vm344, %v332, 0
    %348 = vmatprep.subr.mxu0 0.0
    %349 = vmatpush1.msra.mxu0 %v346
    %350 = vmatprep.subr.mxu0 0.0
    %351 = vmatpush1.msra.mxu0 0.0
    %352 = vmatprep.subr.mxu0 0.0
    %353 = vmatpush1.msra.mxu0 0.0
    %354 = vmatprep.subr.mxu0 0.0
    %355 = vmatpush1.msra.mxu0 0.0
    %356 = vmatprep.subr.mxu0 0.0
    %357 = vmatpush1.msra.mxu0 0.0
    %358 = vmatprep.subr.mxu0 0.0
    %359 = vmatpush1.msra.mxu0 0.0
    %360 = vmatprep.subr.mxu0 0.0
    %361 = vmatpush1.msra.mxu0 0.0
    %362 = vmatprep.subr.mxu0 0.0
    %363 = vmatpush1.msra.mxu0 0.0
    %364 = vmatprep.subr.mxu0 0.0
    %365 = vmatpush1.msra.mxu0 0.0
    %366 = vmatprep.subr.mxu0 0.0
    %367 = vmatpush1.msra.mxu0 0.0
    %368 = vmatprep.subr.mxu0 0.0
    %369 = vmatpush1.msra.mxu0 0.0
    %370 = vmatprep.subr.mxu0 0.0
    %371 = vmatpush1.msra.mxu0 0.0
    %372 = vmatprep.subr.mxu0 0.0
    %373 = vmatpush1.msra.mxu0 0.0
    %374 = vmatprep.subr.mxu0 0.0
    %375 = vmatpush1.msra.mxu0 0.0
    %376 = vmatprep.subr.mxu0 0.0
    %377 = vmatpush1.msra.mxu0 0.0
    %378 = vmatprep.subr.mxu0 0.0
    %379 = vmatpush1.msra.mxu0 0.0
    %380 = vmatprep.subr.mxu0 0.0
    %381 = vmatpush1.msra.mxu0 0.0
    %382 = vmatprep.subr.mxu0 0.0
    %383 = vmatpush1.msra.mxu0 0.0
    %384 = vmatprep.subr.mxu0 0.0
    %385 = vmatpush1.msra.mxu0 0.0
    %386 = vmatprep.subr.mxu0 0.0
    %387 = vmatpush1.msra.mxu0 0.0
    %388 = vmatprep.subr.mxu0 0.0
    %389 = vmatpush1.msra.mxu0 0.0
    %390 = vmatprep.subr.mxu0 0.0
    %391 = vmatpush1.msra.mxu0 0.0
    %392 = vmatprep.subr.mxu0 0.0
    %393 = vmatpush1.msra.mxu0 0.0
    %394 = vmatprep.subr.mxu0 0.0
    %395 = vmatpush1.msra.mxu0 0.0
    %396 = vmatprep.subr.mxu0 0.0
    %397 = vmatpush1.msra.mxu0 0.0
    %398 = vmatprep.subr.mxu0 0.0
    %399 = vmatpush1.msra.mxu0 0.0
    %400 = vmatprep.subr.mxu0 0.0
    %401 = vmatpush1.msra.mxu0 0.0
    %402 = vmatprep.subr.mxu0 0.0
    %403 = vmatpush1.msra.mxu0 0.0
    %404 = vmatprep.subr.mxu0 0.0
    %405 = vmatpush1.msra.mxu0 0.0
    %406 = vmatprep.subr.mxu0 0.0
    %407 = vmatpush1.msra.mxu0 0.0
    %408 = vmatprep.subr.mxu0 0.0
    %409 = vmatpush1.msra.mxu0 0.0
    %410 = vmatprep.subr.mxu0 0.0
    %411 = vmatpush1.msra.mxu0 0.0
    %412 = vmatprep.mubr.f32.mxu0 0.0
    %413 = vmatmul.mubr.f32.gmra.mrb[0].mxu0 %v342
    %v414 = vpop.f32.mrb[0].mxu0
    %v415 = vadd.f32 %v338, %v414
    %v416 = vpop.f32.mrb[0].mxu0
    %417 = vdwg.mxu0
    %v418 = vxor.u32 %v415, 2147483648
    %v419 = vmul.f32 %v418, 1.442695
    %v420 = vpow.pop %v419
    %v421 = vadd.f32 %v420, 1.0
    %v422 = vrcp.pop %v421
    %v423 = vmul.f32 1.0, %v422
    %v424 = vlaneseq
    %v425 = vshrl.u32 %v424, 7
    %v426 = vsub.s32 0, %v425
    %v427 = vrot.slane %v423, %v426
    %429 = vbcast.lane.b32.xlu0 %v427, 256
    %v430 = vpop.permute.xlu0 %429
    %s432 = sor.u32 256, 8
    %433 = vbcast.lane.b32.xlu0 %v427, %s432
    %v434 = vpop.permute.xlu0 %433
    %s436 = sor.u32 256, 16
    %437 = vbcast.lane.b32.xlu0 %v427, %s436
    %v438 = vpop.permute.xlu0 %437
    %s440 = sor.u32 256, 24
    %441 = vbcast.lane.b32.xlu0 %v427, %s440
    %v442 = vpop.permute.xlu0 %441
    %s444 = sor.u32 256, 32
    %445 = vbcast.lane.b32.xlu0 %v427, %s444
    %v446 = vpop.permute.xlu0 %445
    %s448 = sor.u32 256, 40
    %449 = vbcast.lane.b32.xlu0 %v427, %s448
    %v450 = vpop.permute.xlu0 %449
    %s452 = sor.u32 256, 48
    %453 = vbcast.lane.b32.xlu0 %v427, %s452
    %v454 = vpop.permute.xlu0 %453
    %s456 = sor.u32 256, 56
    %457 = vbcast.lane.b32.xlu0 %v427, %s456
    %v458 = vpop.permute.xlu0 %457
    %v459 = vlaneseq
    %v460 = vshrl.u32 %v459, 7
    %v461 = vsub.s32 1, %v460
    %v462 = vrot.slane %v423, %v461
    %464 = vbcast.lane.b32.xlu0 %v462, 256
    %v465 = vpop.permute.xlu0 %464
    %s467 = sor.u32 256, 8
    %468 = vbcast.lane.b32.xlu0 %v462, %s467
    %v469 = vpop.permute.xlu0 %468
    %s471 = sor.u32 256, 16
    %472 = vbcast.lane.b32.xlu0 %v462, %s471
    %v473 = vpop.permute.xlu0 %472
    %s475 = sor.u32 256, 24
    %476 = vbcast.lane.b32.xlu0 %v462, %s475
    %v477 = vpop.permute.xlu0 %476
    %s479 = sor.u32 256, 32
    %480 = vbcast.lane.b32.xlu0 %v462, %s479
    %v481 = vpop.permute.xlu0 %480
    %s483 = sor.u32 256, 40
    %484 = vbcast.lane.b32.xlu0 %v462, %s483
    %v485 = vpop.permute.xlu0 %484
    %s487 = sor.u32 256, 48
    %488 = vbcast.lane.b32.xlu0 %v462, %s487
    %v489 = vpop.permute.xlu0 %488
    %s491 = sor.u32 256, 56
    %492 = vbcast.lane.b32.xlu0 %v462, %s491
    %v493 = vpop.permute.xlu0 %492
    %v494 = vmul.f32 %v35, %v430
    %v495 = vmul.f32 %v36, %v430
    %v496 = vmul.f32 %v37, %v434
    %v497 = vmul.f32 %v38, %v434
    %v498 = vmul.f32 %v39, %v438
    %v499 = vmul.f32 %v40, %v438
    %v500 = vmul.f32 %v41, %v442
    %v501 = vmul.f32 %v42, %v442
    %v502 = vmul.f32 %v43, %v446
    %v503 = vmul.f32 %v44, %v446
    %v504 = vmul.f32 %v45, %v450
    %v505 = vmul.f32 %v46, %v450
    %v506 = vmul.f32 %v47, %v454
    %v507 = vmul.f32 %v48, %v454
    %v508 = vmul.f32 %v49, %v458
    %v509 = vmul.f32 %v50, %v458
    %v510 = vmul.f32 %v51, %v465
    %v511 = vmul.f32 %v52, %v465
    %v512 = vmul.f32 %v53, %v469
    %v513 = vmul.f32 %v54, %v469
    %v514 = vmul.f32 %v55, %v473
    %v515 = vmul.f32 %v56, %v473
    %v516 = vmul.f32 %v57, %v477
    %v517 = vmul.f32 %v58, %v477
    %v518 = vmul.f32 %v59, %v481
    %v519 = vmul.f32 %v60, %v481
    %v520 = vmul.f32 %v61, %v485
    %v521 = vmul.f32 %v62, %v485
    %v522 = vmul.f32 %v63, %v489
    %v523 = vmul.f32 %v64, %v489
    %v524 = vmul.f32 %v65, %v493
    %v525 = vmul.f32 %v66, %v493
    %526 = vst [vmem:[#allocation5] sm:$0xff] %v494
    %527 = vst [vmem:[#allocation5 + $0x8] sm:$0xff] %v495
    %528 = vst [vmem:[#allocation5 + $0x10] sm:$0xff] %v496
    %529 = vst [vmem:[#allocation5 + $0x18] sm:$0xff] %v497
    %530 = vst [vmem:[#allocation5 + $0x20] sm:$0xff] %v498
    %531 = vst [vmem:[#allocation5 + $0x28] sm:$0xff] %v499
    %532 = vst [vmem:[#allocation5 + $0x30] sm:$0xff] %v500
    %533 = vst [vmem:[#allocation5 + $0x38] sm:$0xff] %v501
    %534 = vst [vmem:[#allocation5 + $0x40] sm:$0xff] %v502
    %535 = vst [vmem:[#allocation5 + $0x48] sm:$0xff] %v503
    %536 = vst [vmem:[#allocation5 + $0x50] sm:$0xff] %v504
    %537 = vst [vmem:[#allocation5 + $0x58] sm:$0xff] %v505
    %538 = vst [vmem:[#allocation5 + $0x60] sm:$0xff] %v506
    %539 = vst [vmem:[#allocation5 + $0x68] sm:$0xff] %v507
    %540 = vst [vmem:[#allocation5 + $0x70] sm:$0xff] %v508
    %541 = vst [vmem:[#allocation5 + $0x78] sm:$0xff] %v509
    %542 = vst [vmem:[#allocation5 + $0x80] sm:$0xff] %v510
    %543 = vst [vmem:[#allocation5 + $0x88] sm:$0xff] %v511
    %544 = vst [vmem:[#allocation5 + $0x90] sm:$0xff] %v512
    %545 = vst [vmem:[#allocation5 + $0x98] sm:$0xff] %v513
    %546 = vst [vmem:[#allocation5 + $0xa0] sm:$0xff] %v514
    %547 = vst [vmem:[#allocation5 + $0xa8] sm:$0xff] %v515
    %548 = vst [vmem:[#allocation5 + $0xb0] sm:$0xff] %v516
    %549 = vst [vmem:[#allocation5 + $0xb8] sm:$0xff] %v517
    %550 = vst [vmem:[#allocation5 + $0xc0] sm:$0xff] %v518
    %551 = vst [vmem:[#allocation5 + $0xc8] sm:$0xff] %v519
    %552 = vst [vmem:[#allocation5 + $0xd0] sm:$0xff] %v520
    %553 = vst [vmem:[#allocation5 + $0xd8] sm:$0xff] %v521
    %554 = vst [vmem:[#allocation5 + $0xe0] sm:$0xff] %v522
    %555 = vst [vmem:[#allocation5 + $0xe8] sm:$0xff] %v523
    %556 = vst [vmem:[#allocation5 + $0xf0] sm:$0xff] %v524
    %557 = vst [vmem:[#allocation5 + $0xf8] sm:$0xff] %v525
    // Predicated region
    $region26: #{tpu_custom_call.1} parent=1 // pred_check
      _
    $region27: #{tpu_custom_call.1} parent=1 // pred_check_branch
      %559 = sbr.rel (0) target = $region29
    $region28: #{tpu_custom_call.1} parent=1 // pred_region
      %s561 = ssub.s32 4096, 4096
      %562 = vsyncadd [#allocation4], %s561
      %s563 = sshll.u32 [#allocation5], 4
      %s564 = int_to_ptr.vmem [resolvable:$true] %s563
      %569 = dma.vmem_to_hbm [thread:$0]  %s564, 4096, %s5, [#allocation4], 256, 256, 16
    $region29: #{tpu_custom_call.1} parent=1 // pred_fallthru
      _
    // Predicated region
    $region30: #{tpu_custom_call.1} parent=1 // pred_check
      _
    $region31: #{tpu_custom_call.1} parent=1 // pred_check_branch
      %571 = sbr.rel (0) target = $region33
    $region32: #{tpu_custom_call.1} parent=1 // pred_region
      %572 = dma.done [#allocation4], 4096
    $region33: #{tpu_custom_call.1} parent=1 // pred_fallthru
      _
    %573 = vsyncpa [#allocation3], 1
    %574 = vsyncpa [#allocation4], 1

</llo_original>
